<compile_context>
chip_gen: v6e
topology: v6e:2x2x1
jax: 0.10.0
libtpu: 0.0.40
codegen_flags: <defaults>
</compile_context>

<pallas_src>
import functools
from typing import NamedTuple

import jax
import jax.numpy as jnp
from jax.experimental import pallas as pl
from jax.experimental.pallas import tpu as pltpu


DEFAULT_TM = 512
DEFAULT_TN = 512
DEFAULT_TK = 1024
# VMEM budget (bytes) we allow a double-buffered full-K X tile + W panel to
# occupy before falling back to a multi-step K reduction.
_STATIONARY_VMEM_BUDGET = 24 << 20


def _round_up(x, m):
    return ((x + m - 1) // m) * m


def _pad2d(a, rows, cols):
    pr, pc = rows - a.shape[0], cols - a.shape[1]
    if pr == 0 and pc == 0:
        return a
    return jnp.pad(a, ((0, pr), (0, pc)))


class LinearParams(NamedTuple):
    w: jax.Array   # (Kp, Np) padded weight in compute dtype
    b: jax.Array   # (1, Np) padded bias, f32
    k: int         # original in_units
    n: int         # original units
    tn: int        # output-column tile
    tk: int        # reduction tile


def my_linear_kernel(x_ref, w_ref, b_ref, o_ref, acc_ref):
    k = pl.program_id(2)

    @pl.when(k == 0)
    def _init():
        acc_ref[...] = jnp.zeros_like(acc_ref)

    # Pure MXU work in the K loop; f32 accumulation in VMEM scratch.
    acc_ref[...] += jnp.dot(
        x_ref[...], w_ref[...], preferred_element_type=jnp.float32
    )

    @pl.when(k == pl.num_programs(2) - 1)
    def _epilogue():
        # Bias add + ReLU once per output tile (VPU tail hidden under MXU).
        out = acc_ref[...] + b_ref[...]          # (1, tn) broadcasts over rows
        o_ref[...] = jnp.maximum(out, 0.0).astype(o_ref.dtype)


def prepare_params(weight, bias, *, tn=DEFAULT_TN, tk=DEFAULT_TK,
                   compute_dtype=jnp.bfloat16):
    """Pad + cast the static parameters once (at init time, not per call)."""
    K, N = weight.shape
    assert bias.shape == (N,)
    cbytes = jnp.dtype(compute_dtype).itemsize

    tn = min(_round_up(tn, 128), _round_up(N, 128))
    kp128 = _round_up(K, 128)

    # Single-K-pass heuristic: if the double-buffered full-K X tile + W panel
    # fit a conservative VMEM budget, take the whole reduction in one step so
    # W is streamed from HBM exactly once per N block.
    full_k_bytes = 2 * (DEFAULT_TM * kp128 + kp128 * tn) * cbytes
    if full_k_bytes <= _STATIONARY_VMEM_BUDGET:
        tk = kp128
    else:
        tk = min(_round_up(tk, 128), kp128)

    Kp, Np = _round_up(K, tk), _round_up(N, tn)
    # Zero padding is exact: padded K rows of W contribute nothing, padded N
    # columns are sliced off after the kernel.
    w_p = _pad2d(weight.astype(compute_dtype), Kp, Np)
    b_p = _pad2d(bias.astype(jnp.float32).reshape(1, N), 1, Np)
    return LinearParams(w=w_p, b=b_p, k=K, n=N, tn=tn, tk=tk)


@functools.partial(jax.jit, static_argnames=("n_out", "tm", "tn", "tk"))
def _my_linear_call(x, w_p, b_p, *, n_out, tm, tn, tk):
    M, K = x.shape
    Kp, Np = w_p.shape
    cdt = w_p.dtype
    out_dtype = x.dtype
    cbytes = jnp.dtype(cdt).itemsize
    obytes = jnp.dtype(out_dtype).itemsize

    Mp = _round_up(M, tm)
    x_p = _pad2d(x.astype(cdt), Mp, Kp)

    grid = (Mp // tm, Np // tn, Kp // tk)

    # VMEM plan: double-buffered X / W / out blocks + f32 accumulator + bias.
    vmem_needed = (2 * (tm * tk + tk * tn) * cbytes
                   + 2 * tm * tn * obytes
                   + tm * tn * 4
                   + 2 * tn * 4)
    # 1.5x headroom, floored at 32 MiB, capped at 48 MiB (v7x has only 64 MiB
    # physical VMEM per TensorCore).
    vmem_limit = int(min(max(vmem_needed + vmem_needed // 2, 32 << 20), 48 << 20))

    cost = pl.CostEstimate(
        flops=2 * Mp * Np * Kp,
        transcendentals=0,
        bytes_accessed=(Mp * Kp + Kp * Np) * cbytes + Np * 4 + Mp * Np * obytes,
    )

    out_padded = pl.pallas_call(
        my_linear_kernel,
        out_shape=jax.ShapeDtypeStruct((Mp, Np), out_dtype),
        grid=grid,
        in_specs=[
            pl.BlockSpec((tm, tk), lambda i, j, k: (i, k)),   # X tile
            pl.BlockSpec((tk, tn), lambda i, j, k: (k, j)),   # W tile
            pl.BlockSpec((1, tn), lambda i, j, k: (0, j)),    # bias tile
        ],
        out_specs=pl.BlockSpec((tm, tn), lambda i, j, k: (i, j)),
        scratch_shapes=[pltpu.VMEM((tm, tn), jnp.float32)],
        compiler_params=pltpu.CompilerParams(
            dimension_semantics=("parallel", "parallel", "arbitrary"),
            vmem_limit_bytes=vmem_limit,
        ),
        cost_estimate=cost,
    )(x_p, w_p, b_p)

    if Mp == M and Np == n_out:
        return out_padded
    return out_padded[:M, :n_out]


def my_linear(x, params: LinearParams, *, tm=DEFAULT_TM):
    """relu(x @ W + b) using the prepared (pre-padded, pre-cast) parameters."""
    M, K = x.shape
    assert K == params.k, "input feature dim mismatch"
    tn, tk = params.tn, params.tk
    Np = params.w.shape[1]

    # Clamp the M tile to the (8-sublane-rounded) problem size.
    tm = min(_round_up(tm, 8), _round_up(M, 8))
    Mp = _round_up(M, tm)

    # v7x has 2 TensorCores per chip: if both 'parallel' grid axes collapsed
    # to one block and there is enough M to split, halve the M tile so the
    # second core is not idle.
    if Mp // tm == 1 and Np // tn == 1 and M > 256:
        tm = _round_up((M + 1) // 2, 8)

    return _my_linear_call(x, params.w, params.b,
                           n_out=params.n, tm=tm, tn=tn, tk=tk)


if __name__ == "__main__":
    # Deterministic parameter init (torch.randn -> standard normal).
    key = jax.random.PRNGKey(0)
    k_x, k_w, k_b = jax.random.split(key, 3)

    batch, in_units, units = 8, 32, 16
    x = jax.random.normal(k_x, (batch, in_units), dtype=jnp.float32)
    weight = jax.random.normal(k_w, (in_units, units), dtype=jnp.float32)
    bias = jax.random.normal(k_b, (units,), dtype=jnp.float32)

    # Pure-JAX reference of the PyTorch forward.
    ref = jnp.maximum(jnp.matmul(x, weight) + bias, 0.0)

    # Default fast path: bf16 operands on the MXU, f32 accumulation.
    params_bf16 = prepare_params(weight, bias)  # compute_dtype=bf16 default
    out = jax.block_until_ready(my_linear(x, params_bf16))
    assert out.shape == (batch, units)
    assert out.dtype == x.dtype
    assert jnp.allclose(out, ref, atol=1e-1, rtol=5e-2)

    # Strict-accuracy opt-in: f32 operands.
    params_f32 = prepare_params(weight, bias, compute_dtype=jnp.float32)
    out_f32 = jax.block_until_ready(my_linear(x, params_f32))
    assert jnp.allclose(out_f32, ref, atol=1e-5, rtol=1e-5)

    print("KERNEL_OK")
</pallas_src>

<mosaic_0001>
module attributes {stable_mosaic.version = 11 : i64} {
  func.func @my_linear_kernel(%arg0: i32, %arg1: i32, %arg2: i32, %arg3: memref<8x128xbf16, #tpu.memory_space<vmem>>, %arg4: memref<128x128xbf16, #tpu.memory_space<vmem>>, %arg5: memref<1x128xf32, #tpu.memory_space<vmem>>, %arg6: memref<8x128xf32, #tpu.memory_space<vmem>>, %arg7: memref<8x128xf32, #tpu.memory_space<vmem>>) attributes {dimension_semantics = [#tpu.dimension_semantics<parallel>, #tpu.dimension_semantics<parallel>, #tpu.dimension_semantics<arbitrary>], iteration_bounds = array<i64: 1, 1, 1>, scalar_prefetch = 0 : i64, scratch_operands = 1 : i64, tpu.core_type = #tpu.core_type<tc>, window_params = [{transform_indices = @transform_0, window_bounds = array<i64: 8, 128>}, {transform_indices = @transform_1, window_bounds = array<i64: 128, 128>}, {transform_indices = @transform_2, window_bounds = array<i64: 1, 128>}, {transform_indices = @transform_3, window_bounds = array<i64: 8, 128>}]} {
    %c0_i32 = arith.constant 0 : i32
    %0 = arith.cmpi eq, %arg2, %c0_i32 : i32
    %1 = arith.extui %0 : i1 to i32
    %c0_i32_0 = arith.constant 0 : i32
    %2 = arith.cmpi ne, %1, %c0_i32_0 : i32
    scf.if %2 {
      %cst_10 = arith.constant 0.000000e+00 : f32
      %12 = vector.broadcast %cst_10 : f32 to vector<8x128xf32>
      %c0_11 = arith.constant 0 : index
      %c0_12 = arith.constant 0 : index
      %13 = vector.load %arg7[%c0_11, %c0_12] : memref<8x128xf32, #tpu.memory_space<vmem>>, vector<8x128xf32>
      tpu.vector_store %arg7[%c0_11, %c0_12], %12 {strides = array<i32>} : memref<8x128xf32, #tpu.memory_space<vmem>>, vector<8x128xf32>,
    } else {
    }
    %c0 = arith.constant 0 : index
    %c0_1 = arith.constant 0 : index
    %3 = vector.load %arg7[%c0, %c0_1] : memref<8x128xf32, #tpu.memory_space<vmem>>, vector<8x128xf32>
    %c0_2 = arith.constant 0 : index
    %c0_3 = arith.constant 0 : index
    %4 = vector.load %arg3[%c0_2, %c0_3] : memref<8x128xbf16, #tpu.memory_space<vmem>>, vector<8x128xbf16>
    %c0_4 = arith.constant 0 : index
    %c0_5 = arith.constant 0 : index
    %5 = vector.load %arg4[%c0_4, %c0_5] : memref<128x128xbf16, #tpu.memory_space<vmem>>, vector<128x128xbf16>
    %cst = arith.constant dense<0.000000e+00> : vector<8x128xf32>
    %6 = tpu.matmul %4, %5, %cst {dimension_numbers = #tpu.dot_dimension_numbers<[1], [0], [0], [1], [0, 0, 1, 1], [], []>} : vector<8x128xbf16>, vector<128x128xbf16>, vector<8x128xf32> -> vector<8x128xf32>
    %7 = arith.addf %3, %6 : vector<8x128xf32>
    %c0_6 = arith.constant 0 : index
    %c0_7 = arith.constant 0 : index
    %8 = vector.load %arg7[%c0_6, %c0_7] : memref<8x128xf32, #tpu.memory_space<vmem>>, vector<8x128xf32>
    tpu.vector_store %arg7[%c0_6, %c0_7], %7 {strides = array<i32>} : memref<8x128xf32, #tpu.memory_space<vmem>>, vector<8x128xf32>,
    %c0_i32_8 = arith.constant 0 : i32
    %9 = arith.cmpi eq, %arg2, %c0_i32_8 : i32
    %10 = arith.extui %9 : i1 to i32
    %c0_i32_9 = arith.constant 0 : i32
    %11 = arith.cmpi ne, %10, %c0_i32_9 : i32
    scf.if %11 {
      %c0_10 = arith.constant 0 : index
      %c0_11 = arith.constant 0 : index
      %12 = vector.load %arg7[%c0_10, %c0_11] : memref<8x128xf32, #tpu.memory_space<vmem>>, vector<8x128xf32>
      %c0_12 = arith.constant 0 : index
      %c0_13 = arith.constant 0 : index
      %13 = vector.load %arg5[%c0_12, %c0_13] : memref<1x128xf32, #tpu.memory_space<vmem>>, vector<1x128xf32>
      %14 = vector.broadcast %13 : vector<1x128xf32> to vector<8x128xf32>
      %15 = arith.addf %12, %14 : vector<8x128xf32>
      %cst_14 = arith.constant 0.000000e+00 : f32
      %16 = vector.broadcast %cst_14 : f32 to vector<8x128xf32>
      %17 = arith.maximumf %15, %16 : vector<8x128xf32>
      %c0_15 = arith.constant 0 : index
      %c0_16 = arith.constant 0 : index
      %18 = vector.load %arg6[%c0_15, %c0_16] : memref<8x128xf32, #tpu.memory_space<vmem>>, vector<8x128xf32>
      tpu.vector_store %arg6[%c0_15, %c0_16], %17 {strides = array<i32>} : memref<8x128xf32, #tpu.memory_space<vmem>>, vector<8x128xf32>,
    } else {
    }
    return
  }
  func.func @transform_0(%arg0: i32, %arg1: i32, %arg2: i32) -> (i32, i32) {
    %c0_i32 = arith.constant 0 : i32
    return %arg0, %arg2 : i32, i32
  }
  func.func @transform_1(%arg0: i32, %arg1: i32, %arg2: i32) -> (i32, i32) {
    %c0_i32 = arith.constant 0 : i32
    return %arg2, %arg1 : i32, i32
  }
  func.func @transform_2(%arg0: i32, %arg1: i32, %arg2: i32) -> (i32, i32) {
    %c0_i32 = arith.constant 0 : i32
    %c0_i32_0 = arith.constant 0 : i32
    return %c0_i32, %arg1 : i32, i32
  }
  func.func @transform_3(%arg0: i32, %arg1: i32, %arg2: i32) -> (i32, i32) {
    %c0_i32 = arith.constant 0 : i32
    return %arg0, %arg1 : i32, i32
  }
}

</mosaic_0001>

<llo_original>
// kernel: _my_linear_call.1
$region0: #{_my_linear_call.1}
  #allocation0 [shape = 'u32[]', space=smem, size = 0x4, offset = 0x4, fixed_abs, tag = 'smem constant byte address 0x4 - core index']
  #allocation1 [shape = 'u32[144,128]{1,0:T(1,128)}', space=vmem, size = 0x12000, scoped, tag = 'internal scratch']
  #allocation2 [shape = 'f32[8,128]{1,0:T(8,128)}', space=vmem, size = 0x1000, scoped, tag = 'scratch operand']
  %s0 = inlined_call_operand.vmem [shape: bf16[8,128], index: 0, kind: input, shape index: {}]
  %s1 = inlined_call_operand.hbm [shape: bf16[128,128], index: 1, kind: input, shape index: {}]
  %s2 = inlined_call_operand.vmem [shape: f32[1,128], index: 2, kind: input, shape index: {}]
  %s3 = inlined_call_operand.hbm [shape: f32[8,128], index: 3, kind: output, shape index: {}]
  %s4 = sld [smem:[#allocation0]]
  $region34: #{_my_linear_call.1} parent=0
    _
  %s6 = ssub.s32 1, %s4
  %s7 = scalar_select 0, %s6, %s4
  $region1: #{_my_linear_call.1} parent=0
    #allocation3 [shape = 'u8[32768]{0}', space=vmem, size = 0x8000, scoped, tag = 'input window, operand 1, single buffered']
    #allocation4 [shape = 's32[1]{0}', space=sflag, size = 0x4, scoped, tag = 'scoped memory for _my_linear_call.1']
    #allocation5 [shape = 's32[1]{0}', space=sflag, size = 0x4, scoped, tag = 'scoped memory for _my_linear_call.1']
    #allocation6 [shape = 'u8[4096]{0}', space=vmem, size = 0x1000, scoped, tag = 'output window, operand 0, single buffered']
    %8 = vsyncpa [#allocation4], 0
    %9 = vsyncpa [#allocation5], 0
    // Predicated region
    $region2: #{_my_linear_call.1} parent=1 // pred_check
      _
    $region3: #{_my_linear_call.1} parent=1 // pred_check_branch
      %11 = sbr.rel (0) target = $region5
    $region4: #{_my_linear_call.1} parent=1 // pred_region
      _
    $region5: #{_my_linear_call.1} parent=1 // pred_fallthru
      _
    // Predicated region
    $region6: #{_my_linear_call.1} parent=1 // pred_check
      _
    $region7: #{_my_linear_call.1} parent=1 // pred_check_branch
      %13 = sbr.rel (0) target = $region9
    $region8: #{_my_linear_call.1} parent=1 // pred_region
      %s15 = ssub.s32 1024, 1024
      %16 = vsyncadd [#allocation4], %s15
      %s17 = sshll.u32 [#allocation3], 4
      %s18 = int_to_ptr.vmem [resolvable:$true] %s17
      %23 = dma.hbm_to_vmem [thread:$0]  %s1, 1024, %s18, [#allocation4], 64, 64, 4
    $region9: #{_my_linear_call.1} parent=1 // pred_fallthru
      _
    // Predicated region
    $region10: #{_my_linear_call.1} parent=1 // pred_check
      _
    $region11: #{_my_linear_call.1} parent=1 // pred_check_branch
      %25 = sbr.rel (0) target = $region13
    $region12: #{_my_linear_call.1} parent=1 // pred_region
      _
    $region13: #{_my_linear_call.1} parent=1 // pred_fallthru
      _
    // Predicated region
    $region14: #{_my_linear_call.1} parent=1 // pred_check
      _
    $region15: #{_my_linear_call.1} parent=1 // pred_check_branch
      %27 = sbr.rel (0) target = $region17
    $region16: #{_my_linear_call.1} parent=1 // pred_region
      %28 = dma.done [#allocation4], 1024
    $region17: #{_my_linear_call.1} parent=1 // pred_fallthru
      _
    %p30 = scmp.eq.s32.totalorder 0, 0
    // Predicated region
    $region18: #{_my_linear_call.1} parent=1 // pred_check
      %p31 = pneg %p30
    $region19: #{_my_linear_call.1} parent=1 // pred_check_branch
      %33 = sbr.rel (%p31) target = $region21
    $region20: #{_my_linear_call.1} parent=1 // pred_region
      %34 = vst [vmem:[#allocation2] sm:$0xff] 0.0
    $region21: #{_my_linear_call.1} parent=1 // pred_fallthru
      _
    %v35 = vld [vmem:[#allocation2] sm:$0xff]
    %v36 = vld [vmem:[%s0] sm:$0xf]
    %v37 = vld [vmem:[#allocation3] sm:$0xf]
    %v38 = vld [vmem:[#allocation3 + $0x4] sm:$0xf]
    %v39 = vld [vmem:[#allocation3 + $0x8] sm:$0xf]
    %v40 = vld [vmem:[#allocation3 + $0xc] sm:$0xf]
    %v41 = vld [vmem:[#allocation3 + $0x10] sm:$0xf]
    %v42 = vld [vmem:[#allocation3 + $0x14] sm:$0xf]
    %v43 = vld [vmem:[#allocation3 + $0x18] sm:$0xf]
    %v44 = vld [vmem:[#allocation3 + $0x1c] sm:$0xf]
    %v45 = vld [vmem:[#allocation3 + $0x20] sm:$0xf]
    %v46 = vld [vmem:[#allocation3 + $0x24] sm:$0xf]
    %v47 = vld [vmem:[#allocation3 + $0x28] sm:$0xf]
    %v48 = vld [vmem:[#allocation3 + $0x2c] sm:$0xf]
    %v49 = vld [vmem:[#allocation3 + $0x30] sm:$0xf]
    %v50 = vld [vmem:[#allocation3 + $0x34] sm:$0xf]
    %v51 = vld [vmem:[#allocation3 + $0x38] sm:$0xf]
    %v52 = vld [vmem:[#allocation3 + $0x3c] sm:$0xf]
    %v69 = vunpack.c.l.b16 %v37
    %v70 = vunpack.c.l.b16 %v38
    %v71 = vunpack.c.l.b16 %v39
    %v72 = vunpack.c.l.b16 %v40
    %v73 = vunpack.c.l.b16 %v41
    %v74 = vunpack.c.l.b16 %v42
    %v75 = vunpack.c.l.b16 %v43
    %v76 = vunpack.c.l.b16 %v44
    %v77 = vunpack.c.l.b16 %v45
    %v78 = vunpack.c.l.b16 %v46
    %v79 = vunpack.c.l.b16 %v47
    %v80 = vunpack.c.l.b16 %v48
    %v81 = vunpack.c.l.b16 %v49
    %v82 = vunpack.c.l.b16 %v50
    %v83 = vunpack.c.l.b16 %v51
    %v84 = vunpack.c.l.b16 %v52
    %v85 = vpack.c.b16 %v70, %v69
    %v86 = vpack.c.b16 %v72, %v71
    %v87 = vpack.c.b16 %v74, %v73
    %v88 = vpack.c.b16 %v76, %v75
    %v89 = vpack.c.b16 %v78, %v77
    %v90 = vpack.c.b16 %v80, %v79
    %v91 = vpack.c.b16 %v82, %v81
    %v92 = vpack.c.b16 %v84, %v83
    %101 = vmatprep.subr.bf16.mxu0 0
    %102 = vmatpush1.bf16.msra.mxu0 %v92
    %103 = vmatprep.subr.bf16.mxu0 0
    %104 = vmatpush1.bf16.msra.mxu0 %v91
    %105 = vmatprep.subr.bf16.mxu0 0
    %106 = vmatpush1.bf16.msra.mxu0 %v90
    %107 = vmatprep.subr.bf16.mxu0 0
    %108 = vmatpush1.bf16.msra.mxu0 %v89
    %109 = vmatprep.subr.bf16.mxu0 0
    %110 = vmatpush1.bf16.msra.mxu0 %v88
    %111 = vmatprep.subr.bf16.mxu0 0
    %112 = vmatpush1.bf16.msra.mxu0 %v87
    %113 = vmatprep.subr.bf16.mxu0 0
    %114 = vmatpush1.bf16.msra.mxu0 %v86
    %115 = vmatprep.subr.bf16.mxu0 0
    %116 = vmatpush1.bf16.msra.mxu0 %v85
    %117 = vmatprep.subr.bf16.mxu0 0
    %118 = vmatpush2.bf16.msra.mxu0 0
    %119 = vmatprep.subr.bf16.mxu0 0
    %120 = vmatpush2.bf16.msra.mxu0 0
    %121 = vmatprep.subr.bf16.mxu0 0
    %122 = vmatpush2.bf16.msra.mxu0 0
    %123 = vmatprep.subr.bf16.mxu0 0
    %124 = vmatpush2.bf16.msra.mxu0 0
    %125 = vmatprep.subr.bf16.mxu0 0
    %126 = vmatpush2.bf16.msra.mxu0 0
    %127 = vmatprep.subr.bf16.mxu0 0
    %128 = vmatpush2.bf16.msra.mxu0 0
    %129 = vmatprep.subr.bf16.mxu0 0
    %130 = vmatpush2.bf16.msra.mxu0 0
    %131 = vmatprep.subr.bf16.mxu0 0
    %132 = vmatpush2.bf16.msra.mxu0 0
    %133 = vmatprep.mubr.bf16.mxu0 0
    %134 = vmatmul.mubr.bf16.gmra.mxu0 %v36
    %v135 = vpop.f32.mrf.mxu0
    %v136 = vadd.f32 0.0, %v135
    %v137 = vpop.f32.mrf.mxu0
    %v138 = vpop.f32.mrf.mxu0
    %v139 = vpop.f32.mrf.mxu0
    %140 = vdwg.mxu0
    %v141 = vadd.f32 %v35, %v136
    %142 = vst [vmem:[#allocation2] sm:$0xff] %v141
    // Predicated region
    $region22: #{_my_linear_call.1} parent=1 // pred_check
      %p143 = pneg %p30
    $region23: #{_my_linear_call.1} parent=1 // pred_check_branch
      %145 = sbr.rel (%p143) target = $region25
    $region24: #{_my_linear_call.1} parent=1 // pred_region
      %v146 = vld [vmem:[#allocation2] sm:$0xff]
      %v147 = vld [vmem:[%s2] sm:$0x1]
      %v149 = vlaneseq
      %v150 = vshrl.u32 %v149, 7
      %v151 = vsub.s32 0, %v150
      %v152 = vrot.slane %v147, %v151
      %v154 = vadd.f32 %v146, %v152
      %v155 = vmax.f32 %v154, 0.0
      %156 = vst [vmem:[#allocation6] sm:$0xff] %v155
    $region25: #{_my_linear_call.1} parent=1 // pred_fallthru
      _
    // Predicated region
    $region26: #{_my_linear_call.1} parent=1 // pred_check
      _
    $region27: #{_my_linear_call.1} parent=1 // pred_check_branch
      %158 = sbr.rel (0) target = $region29
    $region28: #{_my_linear_call.1} parent=1 // pred_region
      %s160 = ssub.s32 128, 128
      %161 = vsyncadd [#allocation5], %s160
      %s163 = sshll.u32 [#allocation6], 4
      %s164 = int_to_ptr.vmem [resolvable:$true] %s163
      %166 = dma.vmem_to_hbm [thread:$0]  %s164, 128, %s3, [#allocation5]
    $region29: #{_my_linear_call.1} parent=1 // pred_fallthru
      _
    // Predicated region
    $region30: #{_my_linear_call.1} parent=1 // pred_check
      _
    $region31: #{_my_linear_call.1} parent=1 // pred_check_branch
      %168 = sbr.rel (0) target = $region33
    $region32: #{_my_linear_call.1} parent=1 // pred_region
      %169 = dma.done [#allocation5], 128
    $region33: #{_my_linear_call.1} parent=1 // pred_fallthru
      _
    %170 = vsyncpa [#allocation4], 1
    %171 = vsyncpa [#allocation5], 1

</llo_original>
